<compile_context>
chip_gen: v7x
topology: tpu7x:2x2x1
jax: 0.10.0
libtpu: 0.0.40
codegen_flags: <defaults>
</compile_context>

<pallas_src>
import jax
import jax.numpy as jnp
from jax.experimental import pallas as pl
from jax.experimental.pallas import tpu as pltpu


def _fused_kernel(x_ref, w_ref, b_ref, o_ref):
    # x_ref : (B, F, L) f32 in VMEM  -- input kept in NCL layout, L on the lane axis
    # w_ref : (O*F,)    f32 in SMEM  -- flattened Linear weight (row-major)
    # b_ref : (O,)      f32 in SMEM  -- Linear bias
    # o_ref : (B, L, O) f32 in VMEM  -- already in the module's output order
    B, F, L = x_ref.shape
    O = o_ref.shape[-1]

    xv = x_ref[...]                                   # single tile load (B, F, L)

    # y[b, o, l] = bias[o] + sum_f w[o, f] * x[b, f, l]
    # VPU broadcast-FMAs only; O == 2 and F == 5 are statically unrolled.
    rows = []
    for o in range(O):
        y = jnp.full((B, 1, L), b_ref[o], dtype=jnp.float32)
        for f in range(F):
            y = y + w_ref[o * F + f] * xv[:, f:f + 1, :]   # (B, 1, L)
        rows.append(y)
    y = jnp.concatenate(rows, axis=1)                 # (B, O, L), L lane-dense

    # Softmax over L (PyTorch implicit dim=1 of the (B, L, 1, O) tensor),
    # done once for both channels: L is the last/lane axis here.
    m = jnp.max(y, axis=-1, keepdims=True)            # (B, O, 1)
    e = jnp.exp(y - m)                                # (B, O, L)
    s = jnp.sum(e, axis=-1, keepdims=True)            # (B, O, 1)
    inv = pl.reciprocal(s, approx=False)              # exact: keeps 1e-5 tolerance
    r = e * inv                                       # (B, O, L)

    # One tiny in-kernel XLU transpose so the store is already in output order.
    o_ref[...] = jnp.transpose(r, (0, 2, 1)).astype(o_ref.dtype)   # (B, L, O)


@jax.jit
def model_forward(x, weight, bias):
    """x: (B, F, L) f32, weight: (O, F) f32, bias: (O,) f32 -> (B, L, 1, O) f32."""
    B, F, L = x.shape
    O = weight.shape[0]
    w_flat = weight.reshape(O * F)

    out_blo = pl.pallas_call(
        _fused_kernel,
        out_shape=jax.ShapeDtypeStruct((B, L, O), jnp.float32),
        in_specs=[
            pl.BlockSpec(memory_space=pltpu.MemorySpace.VMEM),   # x, whole array
            pl.BlockSpec(memory_space=pltpu.MemorySpace.SMEM),   # flat weight
            pl.BlockSpec(memory_space=pltpu.MemorySpace.SMEM),   # bias
        ],
        out_specs=pl.BlockSpec(memory_space=pltpu.MemorySpace.VMEM),
    )(x, w_flat, bias)

    # Unit-dim insert only: (B, L, O) -> (B, L, 1, O). No transpose, no data
    # movement; under jit this is a bitcast-style reshape.
    return out_blo[:, :, None, :]


def _reference(x, weight, bias):
    v1 = jnp.transpose(x, (0, 2, 1))                # (B, L, F)
    v2 = v1 @ weight.T + bias                       # (B, L, O)
    v3 = v2[:, :, None, :]                          # (B, L, 1, O)
    return jax.nn.softmax(v3, axis=1)               # implicit dim=1 (over L)


if __name__ == "__main__":
    key = jax.random.PRNGKey(0)
    kx, kw, kb = jax.random.split(key, 3)

    B, F, L, O = 2, 5, 8, 2                         # Linear(5, 2)
    x = jax.random.normal(kx, (B, F, L), dtype=jnp.float32)
    # deterministic "module" parameters (synthetic init, Linear-like scale)
    bound = 1.0 / (F ** 0.5)
    weight = jax.random.uniform(kw, (O, F), minval=-bound, maxval=bound,
                                dtype=jnp.float32)
    bias = jax.random.uniform(kb, (O,), minval=-bound, maxval=bound,
                              dtype=jnp.float32)

    out = model_forward(x, weight, bias)
    out = jax.block_until_ready(out)

    ref = _reference(x, weight, bias)
    assert out.shape == (B, L, 1, O), out.shape
    assert jnp.allclose(out, ref, atol=1e-5, rtol=1e-5), "mismatch vs reference"

    print("KERNEL_OK")
</pallas_src>

<mosaic_0001>
module attributes {stable_mosaic.version = 11 : i64} {
  func.func @_fused_kernel(%arg0: memref<2x5x8xf32, #tpu.memory_space<vmem>>, %arg1: memref<10xf32, #tpu.memory_space<smem>>, %arg2: memref<2xf32, #tpu.memory_space<smem>>, %arg3: memref<2x8x2xf32, #tpu.memory_space<vmem>>) attributes {dimension_semantics = [], scalar_prefetch = 0 : i64, scratch_operands = 0 : i64, tpu.core_type = #tpu.core_type<tc>} {
    %c0 = arith.constant 0 : index
    %c0_0 = arith.constant 0 : index
    %c0_1 = arith.constant 0 : index
    %0 = vector.load %arg0[%c0, %c0_0, %c0_1] : memref<2x5x8xf32, #tpu.memory_space<vmem>>, vector<2x5x8xf32>
    %c0_2 = arith.constant 0 : index
    %1 = memref.load %arg2[%c0_2] : memref<2xf32, #tpu.memory_space<smem>>
    %2 = vector.broadcast %1 : f32 to vector<2x1x8xf32>
    %c0_3 = arith.constant 0 : index
    %3 = memref.load %arg1[%c0_3] : memref<10xf32, #tpu.memory_space<smem>>
    %4 = vector.extract_strided_slice %0 {offsets = [0, 0, 0], sizes = [2, 1, 8], strides = [1, 1, 1]} : vector<2x5x8xf32> to vector<2x1x8xf32>
    %5 = vector.broadcast %3 : f32 to vector<2x1x8xf32>
    %6 = arith.mulf %5, %4 : vector<2x1x8xf32>
    %7 = arith.addf %2, %6 : vector<2x1x8xf32>
    %c1 = arith.constant 1 : index
    %8 = memref.load %arg1[%c1] : memref<10xf32, #tpu.memory_space<smem>>
    %9 = vector.extract_strided_slice %0 {offsets = [0, 1, 0], sizes = [2, 1, 8], strides = [1, 1, 1]} : vector<2x5x8xf32> to vector<2x1x8xf32>
    %10 = vector.broadcast %8 : f32 to vector<2x1x8xf32>
    %11 = arith.mulf %10, %9 : vector<2x1x8xf32>
    %12 = arith.addf %7, %11 : vector<2x1x8xf32>
    %c2 = arith.constant 2 : index
    %13 = memref.load %arg1[%c2] : memref<10xf32, #tpu.memory_space<smem>>
    %14 = vector.extract_strided_slice %0 {offsets = [0, 2, 0], sizes = [2, 1, 8], strides = [1, 1, 1]} : vector<2x5x8xf32> to vector<2x1x8xf32>
    %15 = vector.broadcast %13 : f32 to vector<2x1x8xf32>
    %16 = arith.mulf %15, %14 : vector<2x1x8xf32>
    %17 = arith.addf %12, %16 : vector<2x1x8xf32>
    %c3 = arith.constant 3 : index
    %18 = memref.load %arg1[%c3] : memref<10xf32, #tpu.memory_space<smem>>
    %19 = vector.extract_strided_slice %0 {offsets = [0, 3, 0], sizes = [2, 1, 8], strides = [1, 1, 1]} : vector<2x5x8xf32> to vector<2x1x8xf32>
    %20 = vector.broadcast %18 : f32 to vector<2x1x8xf32>
    %21 = arith.mulf %20, %19 : vector<2x1x8xf32>
    %22 = arith.addf %17, %21 : vector<2x1x8xf32>
    %c4 = arith.constant 4 : index
    %23 = memref.load %arg1[%c4] : memref<10xf32, #tpu.memory_space<smem>>
    %24 = vector.extract_strided_slice %0 {offsets = [0, 4, 0], sizes = [2, 1, 8], strides = [1, 1, 1]} : vector<2x5x8xf32> to vector<2x1x8xf32>
    %25 = vector.broadcast %23 : f32 to vector<2x1x8xf32>
    %26 = arith.mulf %25, %24 : vector<2x1x8xf32>
    %27 = arith.addf %22, %26 : vector<2x1x8xf32>
    %c1_4 = arith.constant 1 : index
    %28 = memref.load %arg2[%c1_4] : memref<2xf32, #tpu.memory_space<smem>>
    %29 = vector.broadcast %28 : f32 to vector<2x1x8xf32>
    %c5 = arith.constant 5 : index
    %30 = memref.load %arg1[%c5] : memref<10xf32, #tpu.memory_space<smem>>
    %31 = vector.extract_strided_slice %0 {offsets = [0, 0, 0], sizes = [2, 1, 8], strides = [1, 1, 1]} : vector<2x5x8xf32> to vector<2x1x8xf32>
    %32 = vector.broadcast %30 : f32 to vector<2x1x8xf32>
    %33 = arith.mulf %32, %31 : vector<2x1x8xf32>
    %34 = arith.addf %29, %33 : vector<2x1x8xf32>
    %c6 = arith.constant 6 : index
    %35 = memref.load %arg1[%c6] : memref<10xf32, #tpu.memory_space<smem>>
    %36 = vector.extract_strided_slice %0 {offsets = [0, 1, 0], sizes = [2, 1, 8], strides = [1, 1, 1]} : vector<2x5x8xf32> to vector<2x1x8xf32>
    %37 = vector.broadcast %35 : f32 to vector<2x1x8xf32>
    %38 = arith.mulf %37, %36 : vector<2x1x8xf32>
    %39 = arith.addf %34, %38 : vector<2x1x8xf32>
    %c7 = arith.constant 7 : index
    %40 = memref.load %arg1[%c7] : memref<10xf32, #tpu.memory_space<smem>>
    %41 = vector.extract_strided_slice %0 {offsets = [0, 2, 0], sizes = [2, 1, 8], strides = [1, 1, 1]} : vector<2x5x8xf32> to vector<2x1x8xf32>
    %42 = vector.broadcast %40 : f32 to vector<2x1x8xf32>
    %43 = arith.mulf %42, %41 : vector<2x1x8xf32>
    %44 = arith.addf %39, %43 : vector<2x1x8xf32>
    %c8 = arith.constant 8 : index
    %45 = memref.load %arg1[%c8] : memref<10xf32, #tpu.memory_space<smem>>
    %46 = vector.extract_strided_slice %0 {offsets = [0, 3, 0], sizes = [2, 1, 8], strides = [1, 1, 1]} : vector<2x5x8xf32> to vector<2x1x8xf32>
    %47 = vector.broadcast %45 : f32 to vector<2x1x8xf32>
    %48 = arith.mulf %47, %46 : vector<2x1x8xf32>
    %49 = arith.addf %44, %48 : vector<2x1x8xf32>
    %c9 = arith.constant 9 : index
    %50 = memref.load %arg1[%c9] : memref<10xf32, #tpu.memory_space<smem>>
    %51 = vector.extract_strided_slice %0 {offsets = [0, 4, 0], sizes = [2, 1, 8], strides = [1, 1, 1]} : vector<2x5x8xf32> to vector<2x1x8xf32>
    %52 = vector.broadcast %50 : f32 to vector<2x1x8xf32>
    %53 = arith.mulf %52, %51 : vector<2x1x8xf32>
    %54 = arith.addf %49, %53 : vector<2x1x8xf32>
    %55 = tpu.concatenate %27, %54 in 1 : vector<2x1x8xf32>, vector<2x1x8xf32> -> vector<2x2x8xf32>
    %cst = arith.constant dense<0xFF800000> : vector<2x2xf32>
    %56 = vector.multi_reduction <maximumf>, %55, %cst [2] : vector<2x2x8xf32> to vector<2x2xf32>
    %57 = vector.shape_cast %56 : vector<2x2xf32> to vector<2x2x1xf32>
    %58 = vector.broadcast %57 : vector<2x2x1xf32> to vector<2x2x8xf32>
    %59 = arith.subf %55, %58 : vector<2x2x8xf32>
    %60 = math.exp %59 : vector<2x2x8xf32>
    %cst_5 = arith.constant dense<0.000000e+00> : vector<2x2xf32>
    %61 = vector.multi_reduction <add>, %60, %cst_5 [2] : vector<2x2x8xf32> to vector<2x2xf32>
    %62 = vector.shape_cast %61 : vector<2x2xf32> to vector<2x2x1xf32>
    %63 = tpu.reciprocal %62 : vector<2x2x1xf32> -> vector<2x2x1xf32>
    %64 = vector.broadcast %63 : vector<2x2x1xf32> to vector<2x2x8xf32>
    %65 = arith.mulf %60, %64 : vector<2x2x8xf32>
    %66 = tpu.transpose %65, [0, 2, 1] : vector<2x2x8xf32> -> vector<2x8x2xf32>
    %c0_6 = arith.constant 0 : index
    %c0_7 = arith.constant 0 : index
    %c0_8 = arith.constant 0 : index
    %67 = vector.load %arg3[%c0_6, %c0_7, %c0_8] : memref<2x8x2xf32, #tpu.memory_space<vmem>>, vector<2x8x2xf32>
    tpu.vector_store %arg3[%c0_6, %c0_7, %c0_8], %66 {strides = array<i32>} : memref<2x8x2xf32, #tpu.memory_space<vmem>>, vector<2x8x2xf32>,
    return
  }
}

</mosaic_0001>

<llo_original>
// kernel: model_forward.1
$region0: #{model_forward.1}
  #allocation0 [shape = 'u32[]', space=smem, size = 0x4, offset = 0x4, fixed_abs, tag = 'smem constant byte address 0x4 - core index']
  #allocation1 [shape = 'u32[144,128]{1,0:T(1,128)}', space=vmem, size = 0x12000, scoped, tag = 'internal scratch']
  %s0 = inlined_call_operand.vmem [shape: f32[2,5,8], index: 0, kind: input, shape index: {}]
  %s1 = inlined_call_operand.vmem [shape: f32[10], index: 1, kind: input, shape index: {}]
  %s2 = inlined_call_operand.vmem [shape: f32[2], index: 2, kind: input, shape index: {}]
  %s3 = inlined_call_operand.vmem [shape: f32[2,8,2], index: 3, kind: output, shape index: {}]
  %s4 = sld [smem:[#allocation0]]
  $region30: #{model_forward.1} parent=0
    _
  %s6 = ssub.s32 1, %s4
  %s7 = scalar_select 0, %s6, %s4
  $region1: #{model_forward.1} parent=0
    #allocation2 [shape = 'u8[512]{0}', space=smem, size = 0x200, scoped, tag = 'input window, operand 1, single buffered']
    #allocation3 [shape = 's32[1]{0}', space=sflag, size = 0x4, scoped, tag = 'scoped memory for model_forward.1']
    #allocation4 [shape = 'u8[512]{0}', space=smem, size = 0x200, scoped, tag = 'input window, operand 2, single buffered']
    #allocation5 [shape = 's32[1]{0}', space=sflag, size = 0x4, scoped, tag = 'scoped memory for model_forward.1']
    %8 = vsyncpa [#allocation3], 0
    %9 = vsyncpa [#allocation5], 0
    // Predicated region
    $region2: #{model_forward.1} parent=1 // pred_check
      _
    $region3: #{model_forward.1} parent=1 // pred_check_branch
      %11 = sbr.rel (0) target = $region5
    $region4: #{model_forward.1} parent=1 // pred_region
      _
    $region5: #{model_forward.1} parent=1 // pred_fallthru
      _
    // Predicated region
    $region6: #{model_forward.1} parent=1 // pred_check
      _
    $region7: #{model_forward.1} parent=1 // pred_check_branch
      %13 = sbr.rel (0) target = $region9
    $region8: #{model_forward.1} parent=1 // pred_region
      %s15 = ssub.s32 16, 16
      %16 = vsyncadd [#allocation3], %s15
      %s18 = sshll.u32 %s1, 4
      %s19 = int_to_ptr.vmem [resolvable:$true] %s18
      %21 = dma.vmem_to_smem %s19, 16, [#allocation2], [#allocation3]
    $region9: #{model_forward.1} parent=1 // pred_fallthru
      _
    // Predicated region
    $region10: #{model_forward.1} parent=1 // pred_check
      _
    $region11: #{model_forward.1} parent=1 // pred_check_branch
      %23 = sbr.rel (0) target = $region13
    $region12: #{model_forward.1} parent=1 // pred_region
      %s25 = ssub.s32 16, 16
      %26 = vsyncadd [#allocation5], %s25
      %s28 = sshll.u32 %s2, 4
      %s29 = int_to_ptr.vmem [resolvable:$true] %s28
      %31 = dma.vmem_to_smem %s29, 16, [#allocation4], [#allocation5]
    $region13: #{model_forward.1} parent=1 // pred_fallthru
      _
    // Predicated region
    $region14: #{model_forward.1} parent=1 // pred_check
      _
    $region15: #{model_forward.1} parent=1 // pred_check_branch
      %33 = sbr.rel (0) target = $region17
    $region16: #{model_forward.1} parent=1 // pred_region
      %34 = dma.done [#allocation3], 16
    $region17: #{model_forward.1} parent=1 // pred_fallthru
      _
    // Predicated region
    $region18: #{model_forward.1} parent=1 // pred_check
      _
    $region19: #{model_forward.1} parent=1 // pred_check_branch
      %36 = sbr.rel (0) target = $region21
    $region20: #{model_forward.1} parent=1 // pred_region
      %37 = dma.done [#allocation5], 16
    $region21: #{model_forward.1} parent=1 // pred_fallthru
      _
    %38 = sfence
    %v39 = vld [vmem:[%s0] sm:$0x1f]
    %v40 = vld [vmem:[%s0 + $0x8] sm:$0x1f]
    %s41 = sld [smem:[#allocation4]]
    %v42 = vstv %s41
    %s43 = sld [smem:[#allocation2]]
    %v44 = vstv %s43
    %v45 = vmul.f32 %v44, %v39
    %v46 = vmul.f32 %v44, %v40
    %v47 = vadd.f32 %v42, %v45
    %v48 = vadd.f32 %v42, %v46
    %s49 = sld [smem:[#allocation2 + $0x1]]
    %v50 = vstv %s49
    %v51 = vmul.f32 %v50, %v39
    %v52 = vmul.f32 %v50, %v40
    %v55 = vrot.slane %v51, 1
    %v56 = vrot.slane %v52, 1
    %v59 = vadd.f32 %v47, %v55
    %v60 = vadd.f32 %v48, %v56
    %s61 = sld [smem:[#allocation2 + $0x2]]
    %v62 = vstv %s61
    %v63 = vmul.f32 %v62, %v39
    %v64 = vmul.f32 %v62, %v40
    %v67 = vrot.slane %v63, 2
    %v68 = vrot.slane %v64, 2
    %v71 = vadd.f32 %v59, %v67
    %v72 = vadd.f32 %v60, %v68
    %s73 = sld [smem:[#allocation2 + $0x3]]
    %v74 = vstv %s73
    %v75 = vmul.f32 %v74, %v39
    %v76 = vmul.f32 %v74, %v40
    %v79 = vrot.slane %v75, 3
    %v80 = vrot.slane %v76, 3
    %v83 = vadd.f32 %v71, %v79
    %v84 = vadd.f32 %v72, %v80
    %s85 = sld [smem:[#allocation2 + $0x4]]
    %v86 = vstv %s85
    %v87 = vmul.f32 %v86, %v39
    %v88 = vmul.f32 %v86, %v40
    %v91 = vrot.slane %v87, 4
    %v92 = vrot.slane %v88, 4
    %v95 = vadd.f32 %v83, %v91
    %v96 = vadd.f32 %v84, %v92
    %s97 = sld [smem:[#allocation4 + $0x1]]
    %v98 = vstv %s97
    %s99 = sld [smem:[#allocation2 + $0x5]]
    %v100 = vstv %s99
    %v101 = vmul.f32 %v100, %v39
    %v102 = vmul.f32 %v100, %v40
    %v103 = vadd.f32 %v98, %v101
    %v104 = vadd.f32 %v98, %v102
    %s105 = sld [smem:[#allocation2 + $0x6]]
    %v106 = vstv %s105
    %v107 = vmul.f32 %v106, %v39
    %v108 = vmul.f32 %v106, %v40
    %v111 = vrot.slane %v107, 1
    %v112 = vrot.slane %v108, 1
    %v115 = vadd.f32 %v103, %v111
    %v116 = vadd.f32 %v104, %v112
    %s117 = sld [smem:[#allocation2 + $0x7]]
    %v118 = vstv %s117
    %v119 = vmul.f32 %v118, %v39
    %v120 = vmul.f32 %v118, %v40
    %v123 = vrot.slane %v119, 2
    %v124 = vrot.slane %v120, 2
    %v127 = vadd.f32 %v115, %v123
    %v128 = vadd.f32 %v116, %v124
    %s129 = sld [smem:[#allocation2 + $0x8]]
    %v130 = vstv %s129
    %v131 = vmul.f32 %v130, %v39
    %v132 = vmul.f32 %v130, %v40
    %v135 = vrot.slane %v131, 3
    %v136 = vrot.slane %v132, 3
    %v139 = vadd.f32 %v127, %v135
    %v140 = vadd.f32 %v128, %v136
    %s141 = sld [smem:[#allocation2 + $0x9]]
    %v142 = vstv %s141
    %v143 = vmul.f32 %v142, %v39
    %v144 = vmul.f32 %v142, %v40
    %v147 = vrot.slane %v143, 4
    %v148 = vrot.slane %v144, 4
    %v151 = vadd.f32 %v139, %v147
    %v152 = vadd.f32 %v140, %v148
    %v155 = vrot.slane %v151, 7
    %v156 = vrot.slane %v152, 7
    %vm159 = vcmask 1040384
    %v160 = vsel %vm159, %v95, %v155
    %v161 = vsel %vm159, %v96, %v156
    %vm162 = vcmask 58368
    %v163 = vsel %vm162, %v160, -inf
    %164 = vmax.xlane.f32.xlu0 %v163
    %v165 = vpop.xlane.xlu0 %164
    %v166 = vsel %vm162, %v161, -inf
    %167 = vmax.xlane.f32.xlu0 %v166
    %v168 = vpop.xlane.xlu0 %167
    %v169 = vsub.f32 %v160, %v165
    %v170 = vsub.f32 %v161, %v168
    %v171 = vmul.f32 %v169, 1.442695
    %v172 = vpow.pop %v171
    %v173 = vmul.f32 %v170, 1.442695
    %v174 = vpow.pop %v173
    %v175 = vsel %vm162, %v172, 0.0
    %176 = vadd.xlane.f32.xlu0 %v175
    %v177 = vpop.xlane.xlu0 %176
    %v178 = vsel %vm162, %v174, 0.0
    %179 = vadd.xlane.f32.xlu0 %v178
    %v180 = vpop.xlane.xlu0 %179
    %v181 = vrcp.pop %v177
    %v182 = vrcp.pop %v180
    %v183 = vmul.f32 %v172, %v181
    %v184 = vmul.f32 %v174, %v182
    %185 = vxpose.xlu0.b32.start [1/16] %v183, 128
    %186 = vxpose.xlu0.b32.cont [2/16] 0.0, 128
    %187 = vxpose.xlu0.b32.cont [3/16] 0.0, 128
    %188 = vxpose.xlu0.b32.cont [4/16] 0.0, 128
    %189 = vxpose.xlu0.b32.cont [5/16] 0.0, 128
    %190 = vxpose.xlu0.b32.cont [6/16] 0.0, 128
    %191 = vxpose.xlu0.b32.cont [7/16] 0.0, 128
    %192 = vxpose.xlu0.b32.cont [8/16] 0.0, 128
    %193 = vxpose.xlu0.b32.cont [9/16] 0.0, 128
    %194 = vxpose.xlu0.b32.cont [10/16] 0.0, 128
    %195 = vxpose.xlu0.b32.cont [11/16] 0.0, 128
    %196 = vxpose.xlu0.b32.cont [12/16] 0.0, 128
    %197 = vxpose.xlu0.b32.cont [13/16] 0.0, 128
    %198 = vxpose.xlu0.b32.cont [14/16] 0.0, 128
    %199 = vxpose.xlu0.b32.cont [15/16] 0.0, 128
    %200 = vxpose.xlu0.b32.end [16/16] 0.0, 128
    %v201 = vpop.trf.xlu0
    %v202 = vpop.trf.xlu0
    %v203 = vpop.trf.xlu0
    %v204 = vpop.trf.xlu0
    %v205 = vpop.trf.xlu0
    %v206 = vpop.trf.xlu0
    %v207 = vpop.trf.xlu0
    %v208 = vpop.trf.xlu0
    %v209 = vpop.trf.xlu0
    %v210 = vpop.trf.xlu0
    %v211 = vpop.trf.xlu0
    %v212 = vpop.trf.xlu0
    %v213 = vpop.trf.xlu0
    %v214 = vpop.trf.xlu0
    %v215 = vpop.trf.xlu0
    %v216 = vpop.trf.xlu0
    %217 = vxpose.xlu0.b32.start [1/16] %v184, 128
    %218 = vxpose.xlu0.b32.cont [2/16] 0.0, 128
    %219 = vxpose.xlu0.b32.cont [3/16] 0.0, 128
    %220 = vxpose.xlu0.b32.cont [4/16] 0.0, 128
    %221 = vxpose.xlu0.b32.cont [5/16] 0.0, 128
    %222 = vxpose.xlu0.b32.cont [6/16] 0.0, 128
    %223 = vxpose.xlu0.b32.cont [7/16] 0.0, 128
    %224 = vxpose.xlu0.b32.cont [8/16] 0.0, 128
    %225 = vxpose.xlu0.b32.cont [9/16] 0.0, 128
    %226 = vxpose.xlu0.b32.cont [10/16] 0.0, 128
    %227 = vxpose.xlu0.b32.cont [11/16] 0.0, 128
    %228 = vxpose.xlu0.b32.cont [12/16] 0.0, 128
    %229 = vxpose.xlu0.b32.cont [13/16] 0.0, 128
    %230 = vxpose.xlu0.b32.cont [14/16] 0.0, 128
    %231 = vxpose.xlu0.b32.cont [15/16] 0.0, 128
    %232 = vxpose.xlu0.b32.end [16/16] 0.0, 128
    %v233 = vpop.trf.xlu0
    %v234 = vpop.trf.xlu0
    %v235 = vpop.trf.xlu0
    %v236 = vpop.trf.xlu0
    %v237 = vpop.trf.xlu0
    %v238 = vpop.trf.xlu0
    %v239 = vpop.trf.xlu0
    %v240 = vpop.trf.xlu0
    %v241 = vpop.trf.xlu0
    %v242 = vpop.trf.xlu0
    %v243 = vpop.trf.xlu0
    %v244 = vpop.trf.xlu0
    %v245 = vpop.trf.xlu0
    %v246 = vpop.trf.xlu0
    %v247 = vpop.trf.xlu0
    %v248 = vpop.trf.xlu0
    %vm249 = vcmask 15360
    %250 = vst.msk [vmem:[%s3] sm:$0xff] %vm249, %v201
    %251 = vst.msk [vmem:[%s3 + $0x8] sm:$0xff] %vm249, %v233
    // Predicated region
    $region22: #{model_forward.1} parent=1 // pred_check
      _
    $region23: #{model_forward.1} parent=1 // pred_check_branch
      %253 = sbr.rel (0) target = $region25
    $region24: #{model_forward.1} parent=1 // pred_region
      _
    $region25: #{model_forward.1} parent=1 // pred_fallthru
      _
    // Predicated region
    $region26: #{model_forward.1} parent=1 // pred_check
      _
    $region27: #{model_forward.1} parent=1 // pred_check_branch
      %255 = sbr.rel (0) target = $region29
    $region28: #{model_forward.1} parent=1 // pred_region
      _
    $region29: #{model_forward.1} parent=1 // pred_fallthru
      _
    %256 = vsyncpa [#allocation3], 1
    %257 = vsyncpa [#allocation5], 1

</llo_original>
